<compile_context>
chip_gen: v5e
topology: v5e:2x2
jax: 0.10.0
libtpu: 0.0.40
codegen_flags: <defaults>
</compile_context>

<pallas_src>
import jax
import jax.numpy as jnp
from jax.experimental import pallas as pl
from jax.experimental.pallas import tpu as pltpu


# ---------------------------------------------------------------------------- kernels

def _kernel_fused(x_ref, w_ref, b_ref, o_ref):
    # x_ref: (TM, D)   w_ref: (D, 2D) cols ordered (p1, p2, c)   b_ref: (1, 2D) f32
    # o_ref: (TBH, 2, W, D) with D == 2*C;  TM == TBH*W
    tbh, _, w, d = o_ref.shape
    y = jax.lax.dot_general(
        x_ref[...], w_ref[...],
        dimension_numbers=(((1,), (0,)), ((), ())),
        preferred_element_type=jnp.float32)
    y = (y + b_ref[...]).astype(o_ref.dtype)          # cast once, before relayout/stores
    # TODO(synk): when W % 8 != 0 this reshape relayouts sublanes; pad W at the model level.
    y = y.reshape(tbh, w, 2 * d)
    o_ref[:, 0, :, :] = y[:, :, :d]                   # p1 = 0 -> even output rows
    o_ref[:, 1, :, :] = y[:, :, d:]                   # p1 = 1 -> odd output rows


def _kernel_split(x_ref, w0_ref, w1_ref, b0_ref, b1_ref, o_ref):
    # x_ref: (TM, D)   w{p1}_ref: (D, D) cols ordered (p2, c)   b{p1}_ref: (1, D) f32
    # o_ref: (TBH, 2, W, D).  Avoids slicing a (TM, 2D) result at a non-128-aligned column.
    tbh, _, w, d = o_ref.shape
    x = x_ref[...]
    y0 = jax.lax.dot_general(x, w0_ref[...],
                             dimension_numbers=(((1,), (0,)), ((), ())),
                             preferred_element_type=jnp.float32)
    o_ref[:, 0, :, :] = (y0 + b0_ref[...]).astype(o_ref.dtype).reshape(tbh, w, d)
    y1 = jax.lax.dot_general(x, w1_ref[...],
                             dimension_numbers=(((1,), (0,)), ((), ())),
                             preferred_element_type=jnp.float32)
    o_ref[:, 1, :, :] = (y1 + b1_ref[...]).astype(o_ref.dtype).reshape(tbh, w, d)


# ---------------------------------------------------------------------------- tiling helpers

def _round_up(n, m):
    return -(-n // m) * m


def _vmem_budget_and_limit():
    """(tile-picker budget, vmem_limit_bytes), generation-aware; conservative fallback."""
    cap = None
    try:
        cap = getattr(pltpu.get_tpu_info(), "vmem_capacity_bytes", None)
    except Exception:
        cap = None
    if cap is not None and cap >= 96 * 1024 * 1024:        # v5e / v6e: 128 MiB VMEM
        return 48 * 1024 * 1024, 64 * 1024 * 1024
    return 20 * 1024 * 1024, 32 * 1024 * 1024              # v7x: 64 MiB VMEM per TC


def _pick_tbh(bh, w, d, n_cols, itemsize, budget, fixed_bytes):
    """Largest divisor of B*H whose (8,128)-padded tile fits `budget`.
    Prefers >=4 grid steps (keeps both v7x TensorCores busy with DMA/compute overlap) and
    caps tiles at 1024 rows (512-row tiles already hit ~85% of the HBM roofline)."""
    row_cap = 1024
    d_pad = _round_up(d, 128)
    n_pad = _round_up(n_cols, 128)
    w_pad = _round_up(w, 8)

    def legal(t):
        return (t * w) % 8 == 0 or t == bh      # (8,128) sublane rule for the (TM, D) x-block

    def fits(t):
        rows = t * w
        rows_pad = _round_up(rows, 8)
        x_blk = 2 * rows_pad * d_pad * itemsize             # input block, double-buffered
        out_blk = 2 * t * 2 * w_pad * d_pad * itemsize      # output block, double-buffered
        interm = 2 * rows_pad * n_pad * 4                   # f32 result (+ possible relayout copy)
        return rows <= row_cap and (x_blk + out_blk + interm + fixed_bytes) <= budget

    cands = [t for t in range(1, bh + 1) if bh % t == 0 and legal(t) and fits(t)]
    if not cands:
        return min(t for t in range(1, bh + 1) if bh % t == 0 and legal(t))
    for min_steps in (4, 2, 1):
        pool = [t for t in cands if bh // t >= min_steps]
        if pool:
            return max(pool)


# ---------------------------------------------------------------------------- wrapper

def patch_unmerging(x, w_conv, b_conv):
    """x: (B, H, W, dim) channels-last.
       w_conv: (2*dim, dim)  -- Conv2d(dim, 2*dim, 1) weight with the 1x1 spatial dims squeezed.
       b_conv: (2*dim,)      -- Conv2d bias.
       Returns (B, 2H, 2W, dim//2), matching Conv1x1 + PixelShuffle(2) of the PyTorch module."""
    B, H, W, D = x.shape
    assert D % 2 == 0, "PixelShuffle(2) requires 2*dim divisible by 4"
    C = D // 2
    D2 = 2 * D
    BH = B * H

    # One-time channel permutation so kernel output column j = p1*(2C) + p2*C + c maps to conv
    # channel c*4 + 2*p1 + p2 (PixelShuffle order); the (K, N) transpose and dtype cast are
    # fused into the same single wrapper copy.
    p1 = jnp.arange(2).reshape(2, 1, 1)
    p2 = jnp.arange(2).reshape(1, 2, 1)
    cc = jnp.arange(C).reshape(1, 1, C)
    perm = (cc * 4 + p1 * 2 + p2).reshape(-1)                 # (2D,), p1-major
    w_k = jnp.transpose(w_conv[perm, :]).astype(x.dtype)      # (D, 2D): clean (M,K)x(K,N) MXU op
    b_k = b_conv[perm].astype(jnp.float32).reshape(1, D2)     # bias stays f32 (added on f32 acc)

    x2 = x.reshape(BH * W, D)                                 # free, contiguous
    itemsize = x.dtype.itemsize
    budget, vmem_limit = _vmem_budget_and_limit()

    fused = (D % 128 == 0) or (D2 <= 256)
    n_cols = D2 if fused else D
    wb_bytes = (_round_up(D, 8) * _round_up(D2, 128) * itemsize if fused
                else 2 * _round_up(D, 8) * _round_up(D, 128) * itemsize)
    wb_bytes += 8 * _round_up(D2, 128) * 4                    # bias (single-buffered, tiny)

    TBH = _pick_tbh(BH, W, D, n_cols, itemsize, budget, wb_bytes)
    TM = TBH * W

    def const_spec(shape):
        # Grid-invariant operand: single-buffered (second pipeline buffer would be pure waste).
        return pl.BlockSpec(shape, lambda i: (0,) * len(shape),
                            pipeline_mode=pl.Buffered(1))

    x_spec = pl.BlockSpec((TM, D), lambda i: (i, 0))
    out_spec = pl.BlockSpec((TBH, 2, W, D), lambda i: (i, 0, 0, 0))

    if fused:
        kernel = _kernel_fused
        operands = (x2, w_k, b_k)
        in_specs = [x_spec, const_spec((D, D2)), const_spec((1, D2))]
    else:
        kernel = _kernel_split
        operands = (x2, w_k[:, :D], w_k[:, D:], b_k[:, :D], b_k[:, D:])
        in_specs = [x_spec, const_spec((D, D)), const_spec((D, D)),
                    const_spec((1, D)), const_spec((1, D))]

    out = pl.pallas_call(
        kernel,
        out_shape=jax.ShapeDtypeStruct((BH, 2, W, D), x.dtype),
        grid_spec=pltpu.PrefetchScalarGridSpec(
            num_scalar_prefetch=0,
            grid=(BH // TBH,),
            in_specs=in_specs,
            out_specs=out_spec,
        ),
        compiler_params=pltpu.CompilerParams(
            dimension_semantics=("parallel",),
            vmem_limit_bytes=vmem_limit,
        ),
    )(*operands)

    # (BH, 2, W, 2C) row-major == (B, 2H, 2W, C) row-major: free reshape, no transpose.
    return out.reshape(B, 2 * H, 2 * W, C)


# ---------------------------------------------------------------------------- reference & test

def _reference(x, w_conv, b_conv):
    """Pure-JAX reference: 1x1 conv (with bias) + PixelShuffle(2), channels-last I/O."""
    B, H, W, D = x.shape
    C = D // 2
    y = jnp.einsum("bhwd,od->bhwo", x.astype(jnp.float32), w_conv.astype(jnp.float32),
                   precision=jax.lax.Precision.HIGHEST) + b_conv.astype(jnp.float32)
    y = y.reshape(B, H, W, C, 2, 2)                   # conv channel o = c*4 + 2*p1 + p2
    y = jnp.transpose(y, (0, 1, 4, 2, 5, 3))          # (B, H, p1, W, p2, C)
    return y.reshape(B, 2 * H, 2 * W, C).astype(x.dtype)


if __name__ == "__main__":
    root = jax.random.PRNGKey(0)

    def check(B, H, W, dim, dtype, tol):
        k1, k2, k3 = jax.random.split(jax.random.fold_in(root, dim), 3)
        x = jax.random.normal(k1, (B, H, W, dim), dtype=jnp.float32).astype(dtype)
        # nn.Conv2d(dim, 2*dim, 1): weight (2*dim, dim, 1, 1) squeezed to (2*dim, dim)
        w_conv = 0.05 * jax.random.normal(k2, (2 * dim, dim), dtype=jnp.float32)
        b_conv = 0.1 * jax.random.normal(k3, (2 * dim,), dtype=jnp.float32)
        out = jax.block_until_ready(patch_unmerging(x, w_conv, b_conv))
        ref = jax.block_until_ready(_reference(x, w_conv, b_conv))
        assert out.shape == (B, 2 * H, 2 * W, dim // 2), out.shape
        err = jnp.max(jnp.abs(out.astype(jnp.float32) - ref.astype(jnp.float32)))
        assert err <= tol, f"mismatch vs reference (dim={dim}, dtype={dtype}, max_err={err})"

    check(2, 8, 8, 32, jnp.float32, 2e-3)     # fused path (2*dim <= 256)
    check(1, 4, 8, 160, jnp.float32, 2e-3)    # split path (dim % 128 != 0, 2*dim > 256)
    check(2, 8, 8, 64, jnp.bfloat16, 3e-2)    # fused path, bf16 activations + bf16 weight
    print("KERNEL_OK")
</pallas_src>

<mosaic_0001>
module attributes {stable_mosaic.version = 11 : i64} {
  func.func @_kernel_fused(%arg0: i32, %arg1: memref<32x32xf32, #tpu.memory_space<vmem>>, %arg2: memref<32x64xf32, #tpu.memory_space<vmem>>, %arg3: memref<1x64xf32, #tpu.memory_space<vmem>>, %arg4: memref<4x2x8x32xf32, #tpu.memory_space<vmem>>) attributes {dimension_semantics = [#tpu.dimension_semantics<parallel>], iteration_bounds = array<i64: 4>, scalar_prefetch = 0 : i64, scratch_operands = 0 : i64, tpu.core_type = #tpu.core_type<tc>, window_params = [{transform_indices = @transform_0, window_bounds = array<i64: 32, 32>}, {pipeline_mode = #tpu.pipeline_mode<synchronous>, transform_indices = @transform_1, window_bounds = array<i64: 32, 64>}, {pipeline_mode = #tpu.pipeline_mode<synchronous>, transform_indices = @transform_2, window_bounds = array<i64: 1, 64>}, {transform_indices = @transform_3, window_bounds = array<i64: 4, 2, 8, 32>}]} {
    %c0 = arith.constant 0 : index
    %c0_0 = arith.constant 0 : index
    %0 = vector.load %arg1[%c0, %c0_0] : memref<32x32xf32, #tpu.memory_space<vmem>>, vector<32x32xf32>
    %c0_1 = arith.constant 0 : index
    %c0_2 = arith.constant 0 : index
    %1 = vector.load %arg2[%c0_1, %c0_2] : memref<32x64xf32, #tpu.memory_space<vmem>>, vector<32x64xf32>
    %cst = arith.constant dense<0.000000e+00> : vector<32x64xf32>
    %2 = tpu.matmul %0, %1, %cst {dimension_numbers = #tpu.dot_dimension_numbers<[1], [0], [0], [1], [0, 0, 1, 1], [], []>} : vector<32x32xf32>, vector<32x64xf32>, vector<32x64xf32> -> vector<32x64xf32>
    %c0_3 = arith.constant 0 : index
    %c0_4 = arith.constant 0 : index
    %3 = vector.load %arg3[%c0_3, %c0_4] : memref<1x64xf32, #tpu.memory_space<vmem>>, vector<1x64xf32>
    %4 = vector.broadcast %3 : vector<1x64xf32> to vector<32x64xf32>
    %5 = arith.addf %2, %4 : vector<32x64xf32>
    %6 = vector.shape_cast %5 : vector<32x64xf32> to vector<4x8x64xf32>
    %7 = vector.extract_strided_slice %6 {offsets = [0, 0, 0], sizes = [4, 8, 32], strides = [1, 1, 1]} : vector<4x8x64xf32> to vector<4x8x32xf32>
    %c0_5 = arith.constant 0 : index
    %c0_6 = arith.constant 0 : index
    %c0_7 = arith.constant 0 : index
    %c0_8 = arith.constant 0 : index
    %8 = vector.load %arg4[%c0_5, %c0_6, %c0_7, %c0_8] : memref<4x2x8x32xf32, #tpu.memory_space<vmem>>, vector<4x1x8x32xf32>
    %9 = vector.shape_cast %8 : vector<4x1x8x32xf32> to vector<4x8x32xf32>
    %10 = vector.shape_cast %7 : vector<4x8x32xf32> to vector<4x1x8x32xf32>
    tpu.vector_store %arg4[%c0_5, %c0_6, %c0_7, %c0_8], %10 {strides = array<i32>} : memref<4x2x8x32xf32, #tpu.memory_space<vmem>>, vector<4x1x8x32xf32>,
    %11 = vector.extract_strided_slice %6 {offsets = [0, 0, 32], sizes = [4, 8, 32], strides = [1, 1, 1]} : vector<4x8x64xf32> to vector<4x8x32xf32>
    %c0_9 = arith.constant 0 : index
    %c1 = arith.constant 1 : index
    %c0_10 = arith.constant 0 : index
    %c0_11 = arith.constant 0 : index
    %12 = vector.load %arg4[%c0_9, %c1, %c0_10, %c0_11] : memref<4x2x8x32xf32, #tpu.memory_space<vmem>>, vector<4x1x8x32xf32>
    %13 = vector.shape_cast %12 : vector<4x1x8x32xf32> to vector<4x8x32xf32>
    %14 = vector.shape_cast %11 : vector<4x8x32xf32> to vector<4x1x8x32xf32>
    tpu.vector_store %arg4[%c0_9, %c1, %c0_10, %c0_11], %14 {strides = array<i32>} : memref<4x2x8x32xf32, #tpu.memory_space<vmem>>, vector<4x1x8x32xf32>,
    return
  }
  func.func @transform_0(%arg0: i32) -> (i32, i32) {
    %c0_i32 = arith.constant 0 : i32
    %c0_i32_0 = arith.constant 0 : i32
    return %arg0, %c0_i32 : i32, i32
  }
  func.func @transform_1(%arg0: i32) -> (i32, i32) {
    %c0_i32 = arith.constant 0 : i32
    %c0_i32_0 = arith.constant 0 : i32
    %c0_i32_1 = arith.constant 0 : i32
    return %c0_i32, %c0_i32_0 : i32, i32
  }
  func.func @transform_2(%arg0: i32) -> (i32, i32) {
    %c0_i32 = arith.constant 0 : i32
    %c0_i32_0 = arith.constant 0 : i32
    %c0_i32_1 = arith.constant 0 : i32
    return %c0_i32, %c0_i32_0 : i32, i32
  }
  func.func @transform_3(%arg0: i32) -> (i32, i32, i32, i32) {
    %c0_i32 = arith.constant 0 : i32
    %c0_i32_0 = arith.constant 0 : i32
    %c0_i32_1 = arith.constant 0 : i32
    %c0_i32_2 = arith.constant 0 : i32
    return %arg0, %c0_i32, %c0_i32_0, %c0_i32_1 : i32, i32, i32, i32
  }
}

</mosaic_0001>

<llo_original>
// kernel: tpu_custom_call.1
$region0: #{tpu_custom_call.1}
  #allocation0 [shape = 'u32[]', space=smem, size = 0x4, offset = 0x4, fixed_abs, tag = 'smem constant byte address 0x4 - core index']
  #allocation1 [shape = 'u32[72,128]{1,0:T(1,128)}', space=vmem, size = 0x9000, scoped, tag = 'internal scratch']
  %s0 = inlined_call_operand.vmem [shape: f32[128,32], index: 0, kind: input, shape index: {}]
  %s1 = inlined_call_operand.vmem [shape: f32[32,64], index: 1, kind: input, shape index: {}]
  %s2 = inlined_call_operand.vmem [shape: f32[1,64], index: 2, kind: input, shape index: {}]
  %s3 = inlined_call_operand.hbm [shape: f32[16,2,8,32], index: 3, kind: output, shape index: {}]
  %s4 = sld [smem:[#allocation0]]
  $region45: #{tpu_custom_call.1} parent=0
    _
  %s6 = ssub.s32 1, %s4
  %s7 = scalar_select 0, %s6, %s4
  $region1: #{tpu_custom_call.1} parent=0
    #allocation2 [shape = 'u8[65536]{0}', space=vmem, size = 0x10000, scoped, tag = 'output window, operand 0']
    #allocation3 [shape = 's32[2]{0}', space=sflag, size = 0x8, scoped, tag = 'scoped memory for tpu_custom_call.1']
    %8 = vsyncpa [#allocation3], 0
    %s9 = scalar_lea.sflag [#allocation3], 1
    %10 = vsyncpa %s9, 0
    loop: start=0, step=1, limit=6
    $region2: #{tpu_custom_call.1} parent=1 // loop_pre_header
      _
    $region3: #{tpu_custom_call.1} parent=1 // loop_header
      %s12 = sphi 0, %s16
      %p13 = scmp.ge.s32.totalorder %s12, 6
      %s22 = sphi 0, %s24
      %s25 = sphi 0, %s22
      %s26 = sphi 0, %s25
      %s42 = sphi 0, %s26
      %s46 = sphi 0, %s46
      %s48 = sphi 0, %s46
      %s49 = sphi 0, %s48
      %s63 = sphi 0, %s49
      %s67 = sphi 0, %s67
      %s69 = sphi 0, %s67
      %s70 = sphi 0, %s69
      %s84 = sphi 0, %s70
      %s90 = sphi 0, %s92
      %s93 = sphi 0, %s90
      %s94 = sphi 0, %s93
      %s110 = sphi 0, %s94
    $region4: #{tpu_custom_call.1} parent=1 // loop_header_branch
      %15 = sbr.rel (%p13) target = $region8
    $region5: #{tpu_custom_call.1} parent=1 // loop_body
      %s17 = ssub.s32 %s12, 1
      %s18 = ssub.s32 %s12, 2
      %s19 = sadd.s32 %s12, 1
      %s20 = ssub.s32 %s12, %s19
      %p21 = scmp.eq.s32.totalorder %s20, 0
      %s23 = sadd.s32 %s22, 1
      %s24 = scalar_select %p21, %s22, %s23
      %p27 = pneg %p21
      %p28 = scmp.eq.s32.totalorder %s12, 3
      %p29 = por %p27, %p28
      %p30 = scmp.ne.s32.totalorder %s22, %s25
      %p31 = scmp.eq.s32.totalorder %s12, 0
      %p32 = por %p30, %p31
      %p33 = scmp.ne.s32.totalorder %s22, %s25
      %p34 = scmp.eq.s32.totalorder %s17, 3
      %p35 = por %p33, %p34
      %p36 = scmp.ne.s32.totalorder %s25, %s26
      %p37 = scmp.eq.s32.totalorder %s17, 0
      %p38 = por %p36, %p37
      %p39 = scmp.ne.s32.totalorder %s25, %s26
      %p40 = scmp.eq.s32.totalorder %s18, 3
      %p41 = por %p39, %p40
      %p43 = scmp.ne.s32.totalorder %s26, %s42
      %p44 = scmp.eq.s32.totalorder %s18, 0
      %p45 = por %p43, %p44
      %s47 = sadd.s32 %s46, 1
      %p50 = scmp.eq.s32.totalorder %s12, 3
      %p51 = scmp.ne.s32.totalorder %s46, %s48
      %p52 = scmp.eq.s32.totalorder %s12, 0
      %p53 = por %p51, %p52
      %p54 = scmp.ne.s32.totalorder %s46, %s48
      %p55 = scmp.eq.s32.totalorder %s17, 3
      %p56 = por %p54, %p55
      %p57 = scmp.ne.s32.totalorder %s48, %s49
      %p58 = scmp.eq.s32.totalorder %s17, 0
      %p59 = por %p57, %p58
      %p60 = scmp.ne.s32.totalorder %s48, %s49
      %p61 = scmp.eq.s32.totalorder %s18, 3
      %p62 = por %p60, %p61
      %p64 = scmp.ne.s32.totalorder %s49, %s63
      %p65 = scmp.eq.s32.totalorder %s18, 0
      %p66 = por %p64, %p65
      %s68 = sadd.s32 %s67, 1
      %p71 = scmp.eq.s32.totalorder %s12, 3
      %p72 = scmp.ne.s32.totalorder %s67, %s69
      %p73 = scmp.eq.s32.totalorder %s12, 0
      %p74 = por %p72, %p73
      %p75 = scmp.ne.s32.totalorder %s67, %s69
      %p76 = scmp.eq.s32.totalorder %s17, 3
      %p77 = por %p75, %p76
      %p78 = scmp.ne.s32.totalorder %s69, %s70
      %p79 = scmp.eq.s32.totalorder %s17, 0
      %p80 = por %p78, %p79
      %p81 = scmp.ne.s32.totalorder %s69, %s70
      %p82 = scmp.eq.s32.totalorder %s18, 3
      %p83 = por %p81, %p82
      %p85 = scmp.ne.s32.totalorder %s70, %s84
      %p86 = scmp.eq.s32.totalorder %s18, 0
      %p87 = por %p85, %p86
      %s88 = ssub.s32 %s12, %s19
      %p89 = scmp.eq.s32.totalorder %s88, 0
      %s91 = sadd.s32 %s90, 1
      %s92 = scalar_select %p89, %s90, %s91
      %p95 = pneg %p89
      %p96 = scmp.eq.s32.totalorder %s12, 3
      %p97 = por %p95, %p96
      %p98 = scmp.ne.s32.totalorder %s90, %s93
      %p99 = scmp.eq.s32.totalorder %s12, 0
      %p100 = por %p98, %p99
      %p101 = scmp.ne.s32.totalorder %s90, %s93
      %p102 = scmp.eq.s32.totalorder %s17, 3
      %p103 = por %p101, %p102
      %p104 = scmp.ne.s32.totalorder %s93, %s94
      %p105 = scmp.eq.s32.totalorder %s17, 0
      %p106 = por %p104, %p105
      %p107 = scmp.ne.s32.totalorder %s93, %s94
      %p108 = scmp.eq.s32.totalorder %s18, 3
      %p109 = por %p107, %p108
      %p111 = scmp.ne.s32.totalorder %s94, %s110
      %p112 = scmp.eq.s32.totalorder %s18, 0
      %p113 = por %p111, %p112
      %p114 = scmp.le.s32.totalorder 1, %s12
      %p115 = scmp.lt.s32.totalorder %s12, 5
      %p116 = pnand %p114, %p115
      %p117 = pneg %p116
      // Predicated region
      $region9: #{tpu_custom_call.1} parent=5 // pred_check
        _
      $region10: #{tpu_custom_call.1} parent=5 // pred_check_branch
        %119 = sbr.rel (%p116) target = $region12
      $region11: #{tpu_custom_call.1} parent=5 // pred_region
        %s120 = ssub.s32 %s12, 1
        // Predicated region
        $region13: #{tpu_custom_call.1} parent=11 // pred_check
          %p121 = pneg %p59
        $region14: #{tpu_custom_call.1} parent=11 // pred_check_branch
          %123 = sbr.rel (%p121) target = $region16
        $region15: #{tpu_custom_call.1} parent=11 // pred_region
          _
        $region16: #{tpu_custom_call.1} parent=11 // pred_fallthru
          _
        // Predicated region
        $region17: #{tpu_custom_call.1} parent=11 // pred_check
          %p124 = pneg %p80
        $region18: #{tpu_custom_call.1} parent=11 // pred_check_branch
          %126 = sbr.rel (%p124) target = $region20
        $region19: #{tpu_custom_call.1} parent=11 // pred_region
          _
        $region20: #{tpu_custom_call.1} parent=11 // pred_fallthru
          _
      $region12: #{tpu_custom_call.1} parent=5 // pred_fallthru
        _
      %p127 = scmp.lt.s32.totalorder %s12, 4
      // Predicated region
      $region21: #{tpu_custom_call.1} parent=5 // pred_check
        %p128 = pneg %p127
      $region22: #{tpu_custom_call.1} parent=5 // pred_check_branch
        %130 = sbr.rel (%p128) target = $region24
      $region23: #{tpu_custom_call.1} parent=5 // pred_region
        // Predicated region
        $region25: #{tpu_custom_call.1} parent=23 // pred_check
          %p131 = pneg %p32
        $region26: #{tpu_custom_call.1} parent=23 // pred_check_branch
          %133 = sbr.rel (%p131) target = $region28
        $region27: #{tpu_custom_call.1} parent=23 // pred_region
          %s134 = smul.u32 4, %s12
          %p135 = scmp.lt.s32.totalorder %s134, 15
          %s136 = scalar_select %p135, %s134, 15
          %s137 = smul.addr %s136, 8
          %s138 = scalar_lea.vmem %s0, %s137
          %s139 = smul.u32 4, %s12
        $region28: #{tpu_custom_call.1} parent=23 // pred_fallthru
          _
      $region24: #{tpu_custom_call.1} parent=5 // pred_fallthru
        _
      %p140 = scmp.le.s32.totalorder 1, %s12
      %p141 = scmp.lt.s32.totalorder %s12, 5
      %p142 = pnand %p140, %p141
      %p143 = pneg %p142
      // Predicated region
      $region29: #{tpu_custom_call.1} parent=5 // pred_check
        _
      $region30: #{tpu_custom_call.1} parent=5 // pred_check_branch
        %145 = sbr.rel (%p142) target = $region32
      $region31: #{tpu_custom_call.1} parent=5 // pred_region
        %s146 = ssub.s32 %s12, 1
        %s147 = smul.u32 4, %s17
        %p148 = scmp.lt.s32.totalorder %s147, 15
        %s149 = scalar_select %p148, %s147, 15
        %s150 = smul.addr %s149, 8
        %s151 = scalar_lea.vmem %s0, %s150
        %p152 = pneg %p38
        %p153 = pneg %p35
        %p154 = pneg %p59
        %p155 = pneg %p56
        %p156 = pneg %p80
        %p157 = pneg %p77
        %p158 = pneg %p106
        %p159 = pneg %p103
        %s160 = sand.u32 %s93, 1
        %s161 = scalar_lea.sflag [#allocation3], %s160
        %s162 = sand.u32 %s93, 1
        %s163 = smul.addr %s162, 64
        %s164 = scalar_lea.vmem [#allocation2], %s163
        %s165 = smul.u32 4, %s17
        %p166 = scmp.lt.s32.totalorder %s165, 15
        %s167 = scalar_select %p166, %s165, 15
        %s168 = smul.addr %s167, 8
        %s169 = scalar_lea.vmem %s0, %s168
        %s170 = smul.u32 4, %s17
        %s171 = smul.u32 4, %s17
        %v172 = vld [vmem:[%s169] sm:$0xff]
        %v173 = vld [vmem:[%s169 + $0x8] sm:$0xff]
        %v174 = vld [vmem:[%s169 + $0x10] sm:$0xff]
        %v175 = vld [vmem:[%s169 + $0x18] sm:$0xff]
        %v176 = vld [vmem:[%s1] sm:$0xff]
        %v177 = vld [vmem:[%s1 + $0x8] sm:$0xff]
        %v178 = vld [vmem:[%s1 + $0x10] sm:$0xff]
        %v179 = vld [vmem:[%s1 + $0x18] sm:$0xff]
        %v180 = vld [vmem:[%s2] sm:$0x1]
        %v182 = vperm.slane %v180, 0
        %vm184 = vcmask 261120
        %v186 = vsel %vm184, %v172, 0
        %v189 = vsel %vm184, %v173, 0
        %v192 = vsel %vm184, %v174, 0
        %v195 = vsel %vm184, %v175, 0
        %197 = vmatpush.msra.mxu0 0.0
        %198 = vmatpush.msra.mxu0 0.0
        %199 = vmatpush.msra.mxu0 0.0
        %200 = vmatpush.msra.mxu0 0.0
        %201 = vmatpush.msra.mxu0 0.0
        %202 = vmatpush.msra.mxu0 0.0
        %203 = vmatpush.msra.mxu0 0.0
        %204 = vmatpush.msra.mxu0 0.0
        %205 = vmatpush.msra.mxu0 0.0
        %206 = vmatpush.msra.mxu0 0.0
        %207 = vmatpush.msra.mxu0 0.0
        %208 = vmatpush.msra.mxu0 0.0
        %209 = vmatpush.msra.mxu0 %v179
        %210 = vmatpush.msra.mxu0 %v178
        %211 = vmatpush.msra.mxu0 %v177
        %212 = vmatpush.msra.mxu0 %v176
        %213 = vmatmul.f32.gmra.mxu0 %v186
        %v214 = vpop.f32.mrf.mxu0
        %v215 = vadd.f32 %v182, %v214
        %216 = vmatmul.f32.gmra.mxu0 %v189
        %v217 = vpop.f32.mrf.mxu0
        %v218 = vadd.f32 %v182, %v217
        %219 = vmatmul.f32.gmra.mxu0 %v192
        %v220 = vpop.f32.mrf.mxu0
        %v221 = vadd.f32 %v182, %v220
        %222 = vmatmul.f32.gmra.mxu0 %v195
        %v223 = vpop.f32.mrf.mxu0
        %v224 = vadd.f32 %v182, %v223
        %225 = vdwg.mxu0
        %226 = vst.msk [vmem:[%s164] sm:$0xff] %vm184, %v215
        %227 = vst.msk [vmem:[%s164 + $0x10] sm:$0xff] %vm184, %v218
        %228 = vst.msk [vmem:[%s164 + $0x20] sm:$0xff] %vm184, %v221
        %229 = vst.msk [vmem:[%s164 + $0x30] sm:$0xff] %vm184, %v224
        %234 = vrot.lane.b32.xlu0 %v215, 96
        %v235 = vpop.permute.xlu0 %234
        %236 = vrot.lane.b32.xlu0 %v218, 96
        %v237 = vpop.permute.xlu0 %236
        %238 = vrot.lane.b32.xlu0 %v221, 96
        %v239 = vpop.permute.xlu0 %238
        %240 = vrot.lane.b32.xlu0 %v224, 96
        %v241 = vpop.permute.xlu0 %240
        %s246 = scalar_lea.vmem %s164, 8 [#allocation2]
        %247 = vst.msk [vmem:[%s246] sm:$0xff] %vm184, %v235
        %248 = vst.msk [vmem:[%s246 + $0x10] sm:$0xff] %vm184, %v237
        %249 = vst.msk [vmem:[%s246 + $0x20] sm:$0xff] %vm184, %v239
        %250 = vst.msk [vmem:[%s246 + $0x30] sm:$0xff] %vm184, %v241
        %s251 = sand.u32 %s93, 1
        %s252 = scalar_lea.sflag [#allocation3], %s251
        %s253 = sand.u32 %s93, 1
        %s254 = smul.addr %s253, 64
        %s255 = scalar_lea.vmem [#allocation2], %s254
        // Predicated region
        $region33: #{tpu_custom_call.1} parent=31 // pred_check
          %p256 = pneg %p103
        $region34: #{tpu_custom_call.1} parent=31 // pred_check_branch
          %258 = sbr.rel (%p256) target = $region36
        $region35: #{tpu_custom_call.1} parent=31 // pred_region
          %s259 = smul.u32 4, %s17
          %261 = vsyncadd %s252, 0
          %s262 = smul.addr %s259, 2
          %s263 = smul.addr %s262, 8
          %s264 = scalar_lea.hbm %s3, %s263
          %s265 = sshll.u32 %s255, 4
          %s266 = int_to_ptr.vmem [resolvable:$true] %s265
          %s267 = sshll.u32 %s264, 4
          %s268 = int_to_ptr.hbm [resolvable:$true] %s267
          %273 = dma.vmem_to_hbm [thread:$0]  %s266, 1024, %s268, %s252, 128, 128, 8
        $region36: #{tpu_custom_call.1} parent=31 // pred_fallthru
          _
      $region32: #{tpu_custom_call.1} parent=5 // pred_fallthru
        _
      %p274 = scmp.le.s32.totalorder 2, %s12
      // Predicated region
      $region37: #{tpu_custom_call.1} parent=5 // pred_check
        %p275 = pneg %p274
      $region38: #{tpu_custom_call.1} parent=5 // pred_check_branch
        %277 = sbr.rel (%p275) target = $region40
      $region39: #{tpu_custom_call.1} parent=5 // pred_region
        %s278 = ssub.s32 %s12, 2
        // Predicated region
        $region41: #{tpu_custom_call.1} parent=39 // pred_check
          %p279 = pneg %p109
        $region42: #{tpu_custom_call.1} parent=39 // pred_check_branch
          %281 = sbr.rel (%p279) target = $region44
        $region43: #{tpu_custom_call.1} parent=39 // pred_region
          %s282 = sand.u32 %s94, 1
          %s283 = scalar_lea.sflag [#allocation3], %s282
          %s284 = sand.u32 %s94, 1
          %s285 = smul.addr %s284, 64
          %s286 = scalar_lea.vmem [#allocation2], %s285
          %288 = dma.done %s283, 1024
        $region44: #{tpu_custom_call.1} parent=39 // pred_fallthru
          _
      $region40: #{tpu_custom_call.1} parent=5 // pred_fallthru
        _
    $region6: #{tpu_custom_call.1} parent=1 // loop_footer
      %s16 = sadd.s32 1, %s12
    $region7: #{tpu_custom_call.1} parent=1 // loop_footer_branch
      %11 = sbr.rel target = $region3
    $region8: #{tpu_custom_call.1} parent=1 // loop_exit
      _
    %289 = vsyncpa [#allocation3], 1
    %s290 = scalar_lea.sflag [#allocation3], 1
    %291 = vsyncpa %s290, 1

</llo_original>
